<compile_context>
chip_gen: v5e
topology: v5e:2x2
jax: 0.10.0
libtpu: 0.0.40
codegen_flags: <defaults>
</compile_context>

<pallas_src>
import functools

import jax
import jax.numpy as jnp
from jax.experimental import pallas as pl
from jax.experimental.pallas import tpu as pltpu


def _round_up(x, m):
    return (x + m - 1) // m * m


# --------------------------------------------------------------------------
# Kernels
# --------------------------------------------------------------------------

def _linear_kernel_1k(compute_dtype, x_ref, w_ref, b_ref, o_ref):
    """Whole feature dim in one K step: grid = (batch tiles, class tiles)."""
    # In-kernel cast (VPU) instead of a padded HBM copy of the activation.
    x = x_ref[...].astype(compute_dtype)
    acc = jnp.dot(x, w_ref[...], preferred_element_type=jnp.float32)
    o_ref[...] = (acc + b_ref[...]).astype(o_ref.dtype)


def _linear_kernel_ktiled(compute_dtype, x_ref, w_ref, b_ref, o_ref, acc_ref):
    """grid = (batch tiles, class tiles, K tiles); K innermost ("arbitrary")."""
    k = pl.program_id(2)

    @pl.when(k == 0)
    def _():
        # Seed the accumulator with the bias so the last-step epilogue is a
        # pure cast+store (bias DMA overlaps the first K step).
        acc_ref[...] = jnp.broadcast_to(b_ref[...], acc_ref.shape)

    x = x_ref[...].astype(compute_dtype)
    acc_ref[...] += jnp.dot(x, w_ref[...], preferred_element_type=jnp.float32)

    @pl.when(k == pl.num_programs(2) - 1)
    def _():
        o_ref[...] = acc_ref[...].astype(o_ref.dtype)


def _linear_kernel_ktiled_f32out(compute_dtype, x_ref, w_ref, b_ref, o_ref):
    """K-tiled variant for f32 outputs: accumulate directly into the resident
    output block (same (i, j) block for every k) -- no f32 scratch needed."""
    k = pl.program_id(2)

    @pl.when(k == 0)
    def _():
        o_ref[...] = jnp.broadcast_to(b_ref[...], o_ref.shape)

    x = x_ref[...].astype(compute_dtype)
    o_ref[...] += jnp.dot(x, w_ref[...], preferred_element_type=jnp.float32)


# --------------------------------------------------------------------------
# Wrapper: equivalent of torch nn.Linear forward, y = x @ weight.T + bias
# --------------------------------------------------------------------------

def make_linear_q(weight, bias, *, compute_dtype=jnp.bfloat16, tn=None, tk=None):
    """Build a forward fn for LinearQ.

    weight: [C, D] (PyTorch layout), bias: [C].  The static parameters are
    padded / cast / transposed ONCE here; the returned callable only streams
    the activation.  NOTE: compute_dtype defaults to bf16 (MXU-native on
    v6e/v7x) which is lower precision than PyTorch's f32 nn.Linear;
    accumulation and the bias add are always f32.  Pass
    compute_dtype=jnp.float32 for bit-closer behaviour.
    """
    C, D = weight.shape

    # K (feature) tiling: one K step whenever D is modest.
    if tk is None:
        tk = _round_up(D, 128) if D <= 1024 else 512
    D_pad = _round_up(D, tk)

    # N (class) tiling: lane-dense, whole padded class dim resident if small.
    if tn is None:
        c128 = _round_up(C, 128)
        tn = c128 if c128 <= 512 else 256
    C_pad = _round_up(C, tn)

    # One-time static-parameter prep (hoisted out of the per-call path):
    # pre-transposed [D_pad, C_pad] weight -> canonical contraction, zero pad
    # so padded K columns contribute 0 and padded classes are sliced off.
    w_p = jnp.zeros((D_pad, C_pad), compute_dtype)
    w_p = w_p.at[:D, :C].set(weight.T.astype(compute_dtype))
    b_p = jnp.zeros((1, C_pad), jnp.float32)
    b_p = b_p.at[0, :C].set(bias.astype(jnp.float32))

    nk = D_pad // tk
    vmem_cap = 32 * 1024 * 1024  # conservative: fits v7x's 64 MiB physical VMEM

    def forward(x):
        B, Din = x.shape
        assert Din == D, f"expected feature dim {D}, got {Din}"
        out_dtype = x.dtype

        tm = min(128, _round_up(B, 8))  # sublane-aligned batch tile
        B_pad = _round_up(B, tm)

        # Pad x only when actually required; keep its original dtype (the
        # cast to compute_dtype happens inside the kernel).
        if (B_pad, D_pad) != (B, D):
            x_in = jnp.zeros((B_pad, D_pad), x.dtype).at[:B, :D].set(x)
        else:
            x_in = x

        if nk == 1:
            grid = (B_pad // tm, C_pad // tn)
            out_padded = pl.pallas_call(
                functools.partial(_linear_kernel_1k, compute_dtype),
                out_shape=jax.ShapeDtypeStruct((B_pad, C_pad), out_dtype),
                grid=grid,
                in_specs=[
                    pl.BlockSpec((tm, tk), lambda i, j: (i, 0)),   # x
                    pl.BlockSpec((tk, tn), lambda i, j: (0, j)),   # weight (resident)
                    pl.BlockSpec((1, tn), lambda i, j: (0, j)),    # bias
                ],
                out_specs=pl.BlockSpec((tm, tn), lambda i, j: (i, j)),
                compiler_params=pltpu.CompilerParams(
                    dimension_semantics=("parallel", "parallel"),
                    vmem_limit_bytes=vmem_cap),
            )(x_in, w_p, b_p)
        else:
            grid = (B_pad // tm, C_pad // tn, nk)
            common = dict(
                out_shape=jax.ShapeDtypeStruct((B_pad, C_pad), out_dtype),
                grid=grid,
                in_specs=[
                    pl.BlockSpec((tm, tk), lambda i, j, k: (i, k)),  # x
                    pl.BlockSpec((tk, tn), lambda i, j, k: (k, j)),  # weight
                    pl.BlockSpec((1, tn), lambda i, j, k: (0, j)),   # bias
                ],
                out_specs=pl.BlockSpec((tm, tn), lambda i, j, k: (i, j)),
                compiler_params=pltpu.CompilerParams(
                    dimension_semantics=("parallel", "parallel", "arbitrary"),
                    vmem_limit_bytes=vmem_cap),
            )
            if jnp.dtype(out_dtype) == jnp.float32:
                # Accumulate directly into the resident f32 output block.
                out_padded = pl.pallas_call(
                    functools.partial(_linear_kernel_ktiled_f32out, compute_dtype),
                    **common)(x_in, w_p, b_p)
            else:
                out_padded = pl.pallas_call(
                    functools.partial(_linear_kernel_ktiled, compute_dtype),
                    scratch_shapes=[pltpu.VMEM((tm, tn), jnp.float32)],
                    **common)(x_in, w_p, b_p)

        return out_padded[:B, :C]

    return forward


if __name__ == "__main__":
    # Deterministic synthetic setup (no checkpoint / .npy loading).
    # input_dim stands in for the ResNet34 feature dim, num_classes for
    # reward_matrix.shape[1] (HAM10k: 7 classes).
    key = jax.random.PRNGKey(0)
    kx, kw, kb = jax.random.split(key, 3)

    batch = 16
    input_dim = 512
    num_classes = 7

    x = jax.random.normal(kx, (batch, input_dim), dtype=jnp.float32)
    # nn.Linear default init: U(-1/sqrt(fan_in), 1/sqrt(fan_in)).
    bound = 1.0 / jnp.sqrt(jnp.float32(input_dim))
    weight = jax.random.uniform(
        kw, (num_classes, input_dim), minval=-bound, maxval=bound,
        dtype=jnp.float32)
    bias = jax.random.uniform(
        kb, (num_classes,), minval=-bound, maxval=bound, dtype=jnp.float32)

    # f32 path (single-K grid): tight check against the plain-JAX reference.
    fwd_f32 = make_linear_q(weight, bias, compute_dtype=jnp.float32)
    out_f32 = fwd_f32(x)
    jax.block_until_ready(out_f32)
    ref_f32 = x @ weight.T + bias
    assert out_f32.shape == (batch, num_classes)
    assert jnp.allclose(out_f32, ref_f32, atol=1e-5, rtol=1e-5)

    # bf16 path (default; MXU-native on v6e/v7x, in-kernel cast of x):
    # compare against a bf16-cast reference so the only difference is f32
    # accumulation order.
    fwd_bf16 = make_linear_q(weight, bias)  # compute_dtype=bf16
    out_bf16 = fwd_bf16(x)
    jax.block_until_ready(out_bf16)
    x_c = x.astype(jnp.bfloat16).astype(jnp.float32)
    w_c = weight.astype(jnp.bfloat16).astype(jnp.float32)
    ref_bf16 = x_c @ w_c.T + bias
    assert out_bf16.shape == (batch, num_classes)
    assert jnp.allclose(out_bf16, ref_bf16, atol=1e-3, rtol=1e-3)

    # Exercise the K-tiled / batch-padded path (D > 1024 -> 3 K steps, B=12
    # padded to the 16-row batch tile, f32 out accumulated in o_ref).
    key2 = jax.random.PRNGKey(1)
    kx2, kw2, kb2 = jax.random.split(key2, 3)
    D2, B2 = 1536, 12
    x2 = jax.random.normal(kx2, (B2, D2), dtype=jnp.float32)
    w2 = jax.random.normal(kw2, (num_classes, D2), dtype=jnp.float32) * 0.02
    b2 = jax.random.normal(kb2, (num_classes,), dtype=jnp.float32) * 0.02
    fwd2 = make_linear_q(w2, b2, compute_dtype=jnp.float32)
    out2 = fwd2(x2)
    jax.block_until_ready(out2)
    ref2 = x2 @ w2.T + b2
    assert out2.shape == (B2, num_classes)
    assert jnp.allclose(out2, ref2, atol=1e-3, rtol=1e-3)

    print("KERNEL_OK")
</pallas_src>

<mosaic_0001>
module attributes {stable_mosaic.version = 11 : i64} {
  func.func @_linear_kernel_1k(%arg0: i32, %arg1: i32, %arg2: memref<16x512xf32, #tpu.memory_space<vmem>>, %arg3: memref<512x128xf32, #tpu.memory_space<vmem>>, %arg4: memref<1x128xf32, #tpu.memory_space<vmem>>, %arg5: memref<16x128xf32, #tpu.memory_space<vmem>>) attributes {dimension_semantics = [#tpu.dimension_semantics<parallel>, #tpu.dimension_semantics<parallel>], iteration_bounds = array<i64: 1, 1>, scalar_prefetch = 0 : i64, scratch_operands = 0 : i64, tpu.core_type = #tpu.core_type<tc>, window_params = [{transform_indices = @transform_0, window_bounds = array<i64: 16, 512>}, {transform_indices = @transform_1, window_bounds = array<i64: 512, 128>}, {transform_indices = @transform_2, window_bounds = array<i64: 1, 128>}, {transform_indices = @transform_3, window_bounds = array<i64: 16, 128>}]} {
    %c0 = arith.constant 0 : index
    %c0_0 = arith.constant 0 : index
    %0 = vector.load %arg2[%c0, %c0_0] : memref<16x512xf32, #tpu.memory_space<vmem>>, vector<16x512xf32>
    %c0_1 = arith.constant 0 : index
    %c0_2 = arith.constant 0 : index
    %1 = vector.load %arg3[%c0_1, %c0_2] : memref<512x128xf32, #tpu.memory_space<vmem>>, vector<512x128xf32>
    %cst = arith.constant dense<0.000000e+00> : vector<16x128xf32>
    %2 = tpu.matmul %0, %1, %cst {dimension_numbers = #tpu.dot_dimension_numbers<[1], [0], [0], [1], [0, 0, 1, 1], [], []>} : vector<16x512xf32>, vector<512x128xf32>, vector<16x128xf32> -> vector<16x128xf32>
    %c0_3 = arith.constant 0 : index
    %c0_4 = arith.constant 0 : index
    %3 = vector.load %arg4[%c0_3, %c0_4] : memref<1x128xf32, #tpu.memory_space<vmem>>, vector<1x128xf32>
    %4 = vector.broadcast %3 : vector<1x128xf32> to vector<16x128xf32>
    %5 = arith.addf %2, %4 : vector<16x128xf32>
    %c0_5 = arith.constant 0 : index
    %c0_6 = arith.constant 0 : index
    %6 = vector.load %arg5[%c0_5, %c0_6] : memref<16x128xf32, #tpu.memory_space<vmem>>, vector<16x128xf32>
    tpu.vector_store %arg5[%c0_5, %c0_6], %5 {strides = array<i32>} : memref<16x128xf32, #tpu.memory_space<vmem>>, vector<16x128xf32>,
    return
  }
  func.func @transform_0(%arg0: i32, %arg1: i32) -> (i32, i32) {
    %c0_i32 = arith.constant 0 : i32
    %c0_i32_0 = arith.constant 0 : i32
    return %arg0, %c0_i32 : i32, i32
  }
  func.func @transform_1(%arg0: i32, %arg1: i32) -> (i32, i32) {
    %c0_i32 = arith.constant 0 : i32
    %c0_i32_0 = arith.constant 0 : i32
    return %c0_i32, %arg1 : i32, i32
  }
  func.func @transform_2(%arg0: i32, %arg1: i32) -> (i32, i32) {
    %c0_i32 = arith.constant 0 : i32
    %c0_i32_0 = arith.constant 0 : i32
    return %c0_i32, %arg1 : i32, i32
  }
  func.func @transform_3(%arg0: i32, %arg1: i32) -> (i32, i32) {
    %c0_i32 = arith.constant 0 : i32
    return %arg0, %arg1 : i32, i32
  }
}

</mosaic_0001>

<llo_original>
// kernel: tpu_custom_call.1
$region0: #{tpu_custom_call.1}
  #allocation0 [shape = 'u32[]', space=smem, size = 0x4, offset = 0x4, fixed_abs, tag = 'smem constant byte address 0x4 - core index']
  #allocation1 [shape = 'u32[72,128]{1,0:T(1,128)}', space=vmem, size = 0x9000, scoped, tag = 'internal scratch']
  %s0 = inlined_call_operand.hbm [shape: f32[16,512], index: 0, kind: input, shape index: {}]
  %s1 = inlined_call_operand.hbm [shape: f32[512,128], index: 1, kind: input, shape index: {}]
  %s2 = inlined_call_operand.vmem [shape: f32[1,128], index: 2, kind: input, shape index: {}]
  %s3 = inlined_call_operand.hbm [shape: f32[16,128], index: 3, kind: output, shape index: {}]
  %s4 = sld [smem:[#allocation0]]
  $region30: #{tpu_custom_call.1} parent=0
    _
  %s6 = ssub.s32 1, %s4
  %s7 = scalar_select 0, %s6, %s4
  $region1: #{tpu_custom_call.1} parent=0
    #allocation2 [shape = 'u8[32768]{0}', space=vmem, size = 0x8000, scoped, tag = 'input window, operand 0, single buffered']
    #allocation3 [shape = 's32[1]{0}', space=sflag, size = 0x4, scoped, tag = 'scoped memory for tpu_custom_call.1']
    #allocation4 [shape = 's32[1]{0}', space=sflag, size = 0x4, scoped, tag = 'scoped memory for tpu_custom_call.1']
    #allocation5 [shape = 'u8[262144]{0}', space=vmem, size = 0x40000, scoped, tag = 'input window, operand 1, single buffered']
    #allocation6 [shape = 's32[1]{0}', space=sflag, size = 0x4, scoped, tag = 'scoped memory for tpu_custom_call.1']
    #allocation7 [shape = 'u8[8192]{0}', space=vmem, size = 0x2000, scoped, tag = 'output window, operand 0, single buffered']
    %8 = vsyncpa [#allocation3], 0
    %9 = vsyncpa [#allocation6], 0
    %10 = vsyncpa [#allocation4], 0
    // Predicated region
    $region2: #{tpu_custom_call.1} parent=1 // pred_check
      _
    $region3: #{tpu_custom_call.1} parent=1 // pred_check_branch
      %12 = sbr.rel (0) target = $region5
    $region4: #{tpu_custom_call.1} parent=1 // pred_region
      %14 = vsyncadd [#allocation3], 0
      %s15 = sshll.u32 %s0, 4
      %s16 = int_to_ptr.hbm [resolvable:$true] %s15
      %s17 = sshll.u32 [#allocation2], 4
      %s18 = int_to_ptr.vmem [resolvable:$true] %s17
      %23 = dma.hbm_to_vmem [thread:$0]  %s16, 1024, %s18, [#allocation3], 512, 512, 32
    $region5: #{tpu_custom_call.1} parent=1 // pred_fallthru
      _
    // Predicated region
    $region6: #{tpu_custom_call.1} parent=1 // pred_check
      _
    $region7: #{tpu_custom_call.1} parent=1 // pred_check_branch
      %25 = sbr.rel (0) target = $region9
    $region8: #{tpu_custom_call.1} parent=1 // pred_region
      %27 = vsyncadd [#allocation6], 0
      %s28 = sshll.u32 %s1, 4
      %s29 = int_to_ptr.hbm [resolvable:$true] %s28
      %s30 = sshll.u32 [#allocation5], 4
      %s31 = int_to_ptr.vmem [resolvable:$true] %s30
      %36 = dma.hbm_to_vmem [thread:$0]  %s29, 8192, %s31, [#allocation6], 128, 128, 8
    $region9: #{tpu_custom_call.1} parent=1 // pred_fallthru
      _
    // Predicated region
    $region10: #{tpu_custom_call.1} parent=1 // pred_check
      _
    $region11: #{tpu_custom_call.1} parent=1 // pred_check_branch
      %38 = sbr.rel (0) target = $region13
    $region12: #{tpu_custom_call.1} parent=1 // pred_region
      _
    $region13: #{tpu_custom_call.1} parent=1 // pred_fallthru
      _
    // Predicated region
    $region14: #{tpu_custom_call.1} parent=1 // pred_check
      _
    $region15: #{tpu_custom_call.1} parent=1 // pred_check_branch
      %40 = sbr.rel (0) target = $region17
    $region16: #{tpu_custom_call.1} parent=1 // pred_region
      %42 = dma.done [#allocation3], 1024
    $region17: #{tpu_custom_call.1} parent=1 // pred_fallthru
      _
    // Predicated region
    $region18: #{tpu_custom_call.1} parent=1 // pred_check
      _
    $region19: #{tpu_custom_call.1} parent=1 // pred_check_branch
      %44 = sbr.rel (0) target = $region21
    $region20: #{tpu_custom_call.1} parent=1 // pred_region
      %46 = dma.done [#allocation6], 8192
    $region21: #{tpu_custom_call.1} parent=1 // pred_fallthru
      _
    %v47 = vld [vmem:[#allocation2] sm:$0xff]
    %v48 = vld [vmem:[#allocation2 + $0x8] sm:$0xff]
    %v49 = vld [vmem:[#allocation2 + $0x10] sm:$0xff]
    %v50 = vld [vmem:[#allocation2 + $0x18] sm:$0xff]
    %v51 = vld [vmem:[#allocation2 + $0x20] sm:$0xff]
    %v52 = vld [vmem:[#allocation2 + $0x28] sm:$0xff]
    %v53 = vld [vmem:[#allocation2 + $0x30] sm:$0xff]
    %v54 = vld [vmem:[#allocation2 + $0x38] sm:$0xff]
    %v55 = vld [vmem:[#allocation5] sm:$0xff]
    %v56 = vld [vmem:[#allocation5 + $0x8] sm:$0xff]
    %v57 = vld [vmem:[#allocation5 + $0x10] sm:$0xff]
    %v58 = vld [vmem:[#allocation5 + $0x18] sm:$0xff]
    %v59 = vld [vmem:[#allocation5 + $0x20] sm:$0xff]
    %v60 = vld [vmem:[#allocation5 + $0x28] sm:$0xff]
    %v61 = vld [vmem:[#allocation5 + $0x30] sm:$0xff]
    %v62 = vld [vmem:[#allocation5 + $0x38] sm:$0xff]
    %v63 = vld [vmem:[#allocation5 + $0x40] sm:$0xff]
    %v64 = vld [vmem:[#allocation5 + $0x48] sm:$0xff]
    %v65 = vld [vmem:[#allocation5 + $0x50] sm:$0xff]
    %v66 = vld [vmem:[#allocation5 + $0x58] sm:$0xff]
    %v67 = vld [vmem:[#allocation5 + $0x60] sm:$0xff]
    %v68 = vld [vmem:[#allocation5 + $0x68] sm:$0xff]
    %v69 = vld [vmem:[#allocation5 + $0x70] sm:$0xff]
    %v70 = vld [vmem:[#allocation5 + $0x78] sm:$0xff]
    %v71 = vld [vmem:[#allocation5 + $0x80] sm:$0xff]
    %v72 = vld [vmem:[#allocation5 + $0x88] sm:$0xff]
    %v73 = vld [vmem:[#allocation5 + $0x90] sm:$0xff]
    %v74 = vld [vmem:[#allocation5 + $0x98] sm:$0xff]
    %v75 = vld [vmem:[#allocation5 + $0xa0] sm:$0xff]
    %v76 = vld [vmem:[#allocation5 + $0xa8] sm:$0xff]
    %v77 = vld [vmem:[#allocation5 + $0xb0] sm:$0xff]
    %v78 = vld [vmem:[#allocation5 + $0xb8] sm:$0xff]
    %v79 = vld [vmem:[#allocation5 + $0xc0] sm:$0xff]
    %v80 = vld [vmem:[#allocation5 + $0xc8] sm:$0xff]
    %v81 = vld [vmem:[#allocation5 + $0xd0] sm:$0xff]
    %v82 = vld [vmem:[#allocation5 + $0xd8] sm:$0xff]
    %v83 = vld [vmem:[#allocation5 + $0xe0] sm:$0xff]
    %v84 = vld [vmem:[#allocation5 + $0xe8] sm:$0xff]
    %v85 = vld [vmem:[#allocation5 + $0xf0] sm:$0xff]
    %v86 = vld [vmem:[#allocation5 + $0xf8] sm:$0xff]
    %v87 = vld [vmem:[#allocation5 + $0x100] sm:$0xff]
    %v88 = vld [vmem:[#allocation5 + $0x108] sm:$0xff]
    %v89 = vld [vmem:[#allocation5 + $0x110] sm:$0xff]
    %v90 = vld [vmem:[#allocation5 + $0x118] sm:$0xff]
    %v91 = vld [vmem:[#allocation5 + $0x120] sm:$0xff]
    %v92 = vld [vmem:[#allocation5 + $0x128] sm:$0xff]
    %v93 = vld [vmem:[#allocation5 + $0x130] sm:$0xff]
    %v94 = vld [vmem:[#allocation5 + $0x138] sm:$0xff]
    %v95 = vld [vmem:[#allocation5 + $0x140] sm:$0xff]
    %v96 = vld [vmem:[#allocation5 + $0x148] sm:$0xff]
    %v97 = vld [vmem:[#allocation5 + $0x150] sm:$0xff]
    %v98 = vld [vmem:[#allocation5 + $0x158] sm:$0xff]
    %v99 = vld [vmem:[#allocation5 + $0x160] sm:$0xff]
    %v100 = vld [vmem:[#allocation5 + $0x168] sm:$0xff]
    %v101 = vld [vmem:[#allocation5 + $0x170] sm:$0xff]
    %v102 = vld [vmem:[#allocation5 + $0x178] sm:$0xff]
    %v103 = vld [vmem:[#allocation5 + $0x180] sm:$0xff]
    %v104 = vld [vmem:[#allocation5 + $0x188] sm:$0xff]
    %v105 = vld [vmem:[#allocation5 + $0x190] sm:$0xff]
    %v106 = vld [vmem:[#allocation5 + $0x198] sm:$0xff]
    %v107 = vld [vmem:[#allocation5 + $0x1a0] sm:$0xff]
    %v108 = vld [vmem:[#allocation5 + $0x1a8] sm:$0xff]
    %v109 = vld [vmem:[#allocation5 + $0x1b0] sm:$0xff]
    %v110 = vld [vmem:[#allocation5 + $0x1b8] sm:$0xff]
    %v111 = vld [vmem:[#allocation5 + $0x1c0] sm:$0xff]
    %v112 = vld [vmem:[#allocation5 + $0x1c8] sm:$0xff]
    %v113 = vld [vmem:[#allocation5 + $0x1d0] sm:$0xff]
    %v114 = vld [vmem:[#allocation5 + $0x1d8] sm:$0xff]
    %v115 = vld [vmem:[#allocation5 + $0x1e0] sm:$0xff]
    %v116 = vld [vmem:[#allocation5 + $0x1e8] sm:$0xff]
    %v117 = vld [vmem:[#allocation5 + $0x1f0] sm:$0xff]
    %v118 = vld [vmem:[#allocation5 + $0x1f8] sm:$0xff]
    %v119 = vld [vmem:[%s2] sm:$0x1]
    %v121 = vperm.slane %v119, 0
    %123 = vmatpush.msra.mxu0 %v70
    %124 = vmatpush.msra.mxu0 %v69
    %125 = vmatpush.msra.mxu0 %v68
    %126 = vmatpush.msra.mxu0 %v67
    %127 = vmatpush.msra.mxu0 %v66
    %128 = vmatpush.msra.mxu0 %v65
    %129 = vmatpush.msra.mxu0 %v64
    %130 = vmatpush.msra.mxu0 %v63
    %131 = vmatpush.msra.mxu0 %v62
    %132 = vmatpush.msra.mxu0 %v61
    %133 = vmatpush.msra.mxu0 %v60
    %134 = vmatpush.msra.mxu0 %v59
    %135 = vmatpush.msra.mxu0 %v58
    %136 = vmatpush.msra.mxu0 %v57
    %137 = vmatpush.msra.mxu0 %v56
    %138 = vmatpush.msra.mxu0 %v55
    %139 = vmatmul.f32.gmra.mxu0 %v47
    %v140 = vpop.f32.mrf.mxu0
    %v141 = vadd.f32 %v121, %v140
    %142 = vmatmul.f32.gmra.mxu0 %v51
    %v143 = vpop.f32.mrf.mxu0
    %v144 = vadd.f32 %v121, %v143
    %145 = vdwg.mxu0
    %146 = vmatpush.msra.mxu0 %v86
    %147 = vmatpush.msra.mxu0 %v85
    %148 = vmatpush.msra.mxu0 %v84
    %149 = vmatpush.msra.mxu0 %v83
    %150 = vmatpush.msra.mxu0 %v82
    %151 = vmatpush.msra.mxu0 %v81
    %152 = vmatpush.msra.mxu0 %v80
    %153 = vmatpush.msra.mxu0 %v79
    %154 = vmatpush.msra.mxu0 %v78
    %155 = vmatpush.msra.mxu0 %v77
    %156 = vmatpush.msra.mxu0 %v76
    %157 = vmatpush.msra.mxu0 %v75
    %158 = vmatpush.msra.mxu0 %v74
    %159 = vmatpush.msra.mxu0 %v73
    %160 = vmatpush.msra.mxu0 %v72
    %161 = vmatpush.msra.mxu0 %v71
    %162 = vmatmul.f32.gmra.mxu0 %v48
    %v163 = vpop.f32.mrf.mxu0
    %v164 = vadd.f32 %v141, %v163
    %165 = vmatmul.f32.gmra.mxu0 %v52
    %v166 = vpop.f32.mrf.mxu0
    %v167 = vadd.f32 %v144, %v166
    %168 = vdwg.mxu0
    %169 = vmatpush.msra.mxu0 %v102
    %170 = vmatpush.msra.mxu0 %v101
    %171 = vmatpush.msra.mxu0 %v100
    %172 = vmatpush.msra.mxu0 %v99
    %173 = vmatpush.msra.mxu0 %v98
    %174 = vmatpush.msra.mxu0 %v97
    %175 = vmatpush.msra.mxu0 %v96
    %176 = vmatpush.msra.mxu0 %v95
    %177 = vmatpush.msra.mxu0 %v94
    %178 = vmatpush.msra.mxu0 %v93
    %179 = vmatpush.msra.mxu0 %v92
    %180 = vmatpush.msra.mxu0 %v91
    %181 = vmatpush.msra.mxu0 %v90
    %182 = vmatpush.msra.mxu0 %v89
    %183 = vmatpush.msra.mxu0 %v88
    %184 = vmatpush.msra.mxu0 %v87
    %185 = vmatmul.f32.gmra.mxu0 %v49
    %v186 = vpop.f32.mrf.mxu0
    %v187 = vadd.f32 %v164, %v186
    %188 = vmatmul.f32.gmra.mxu0 %v53
    %v189 = vpop.f32.mrf.mxu0
    %v190 = vadd.f32 %v167, %v189
    %191 = vdwg.mxu0
    %192 = vmatpush.msra.mxu0 %v118
    %193 = vmatpush.msra.mxu0 %v117
    %194 = vmatpush.msra.mxu0 %v116
    %195 = vmatpush.msra.mxu0 %v115
    %196 = vmatpush.msra.mxu0 %v114
    %197 = vmatpush.msra.mxu0 %v113
    %198 = vmatpush.msra.mxu0 %v112
    %199 = vmatpush.msra.mxu0 %v111
    %200 = vmatpush.msra.mxu0 %v110
    %201 = vmatpush.msra.mxu0 %v109
    %202 = vmatpush.msra.mxu0 %v108
    %203 = vmatpush.msra.mxu0 %v107
    %204 = vmatpush.msra.mxu0 %v106
    %205 = vmatpush.msra.mxu0 %v105
    %206 = vmatpush.msra.mxu0 %v104
    %207 = vmatpush.msra.mxu0 %v103
    %208 = vmatmul.f32.gmra.mxu0 %v50
    %v209 = vpop.f32.mrf.mxu0
    %v210 = vadd.f32 %v187, %v209
    %211 = vmatmul.f32.gmra.mxu0 %v54
    %v212 = vpop.f32.mrf.mxu0
    %v213 = vadd.f32 %v190, %v212
    %214 = vdwg.mxu0
    %215 = vst [vmem:[#allocation7] sm:$0xff] %v210
    %216 = vst [vmem:[#allocation7 + $0x8] sm:$0xff] %v213
    // Predicated region
    $region22: #{tpu_custom_call.1} parent=1 // pred_check
      _
    $region23: #{tpu_custom_call.1} parent=1 // pred_check_branch
      %218 = sbr.rel (0) target = $region25
    $region24: #{tpu_custom_call.1} parent=1 // pred_region
      %220 = vsyncadd [#allocation4], 0
      %s221 = sshll.u32 [#allocation7], 4
      %s222 = int_to_ptr.vmem [resolvable:$true] %s221
      %s223 = sshll.u32 %s3, 4
      %s224 = int_to_ptr.hbm [resolvable:$true] %s223
      %229 = dma.vmem_to_hbm [thread:$0]  %s222, 256, %s224, [#allocation4], 128, 128, 8
    $region25: #{tpu_custom_call.1} parent=1 // pred_fallthru
      _
    // Predicated region
    $region26: #{tpu_custom_call.1} parent=1 // pred_check
      _
    $region27: #{tpu_custom_call.1} parent=1 // pred_check_branch
      %231 = sbr.rel (0) target = $region29
    $region28: #{tpu_custom_call.1} parent=1 // pred_region
      %233 = dma.done [#allocation4], 256
    $region29: #{tpu_custom_call.1} parent=1 // pred_fallthru
      _
    %234 = vsyncpa [#allocation3], 1
    %235 = vsyncpa [#allocation6], 1
    %236 = vsyncpa [#allocation4], 1

</llo_original>
